<compile_context>
chip_gen: v7x
topology: tpu7x:2x2x1
jax: 0.10.0
libtpu: 0.0.40
codegen_flags: <defaults>
</compile_context>

<pallas_src>
import functools
import math

import jax
import jax.numpy as jnp
from jax import lax
from jax.experimental import pallas as pl
from jax.experimental.pallas import tpu as pltpu

_EPS = 1e-5
_LANES = 128
_MAX_GROUPS = 8


def _layernorm_kernel(x_ref, segt_ref, segtg_ref, beta_ref, o_ref, *, dim, eps):
    """LayerNorm over per-row segments of `dim` lanes in a (TR, g*dim) block.

    Each packed row holds `g` original rows side by side along the lane axis,
    so loads/stores are lane-dense.  segt_ref is the (g, Dp) 0/1 group mask
    (reduction matrix); segtg_ref is segt * gamma (expansion matrix with the
    affine scale pre-folded).  Both ride the otherwise idle MXU; rsqrt runs
    only on the narrow (TR, g) stats.
    """
    x = x_ref[...].astype(jnp.float32)                 # (TR, Dp)
    segt = segt_ref[...]                               # (g, Dp)  0/1 mask
    segtg = segtg_ref[...]                             # (g, Dp)  mask * gamma
    beta = beta_ref[...]                               # (1, Dp)

    inv_dim = 1.0 / dim
    dn = (((1,), (1,)), ((), ()))                      # contract lane axes
    s1 = lax.dot_general(x, segt, dn, preferred_element_type=jnp.float32)      # (TR, g)
    s2 = lax.dot_general(x * x, segt, dn, preferred_element_type=jnp.float32)  # (TR, g)
    mean = s1 * inv_dim
    var = jnp.maximum(s2 * inv_dim - mean * mean, 0.0)  # one-pass var, clamped
    inv = lax.rsqrt(var + eps)                          # (TR, g)

    # Expand per-group stats back to full lane width; gamma is already folded
    # into the expansion matrix, so no full-width gamma multiply is needed.
    scale = jnp.dot(inv, segtg, preferred_element_type=jnp.float32)         # (TR, Dp)
    offset = jnp.dot(mean * inv, segtg, preferred_element_type=jnp.float32)  # (TR, Dp)
    y = x * scale - offset + beta
    o_ref[...] = y.astype(o_ref.dtype)


def _choose_tile_rows(rows_packed, d_packed, itemsize):
    """Row-tile sized against the real VMEM footprint; guarantees >=2 grid steps."""
    # 2 double-buffered input tiles + 2 double-buffered output tiles (x.dtype)
    # plus ~2 tile-sized f32 temporaries (x cast and x*x live as matmul
    # operands).  24 MiB budget keeps the kernel under the 32 MiB scoped-VMEM
    # limit that holds on all of v5e / v6e / v7x.
    per_row_bytes = d_packed * (4 * itemsize + 2 * 4)
    budget_bytes = 24 * 1024 * 1024
    max_tile = max(8, (budget_bytes // per_row_bytes) // 8 * 8)
    if rows_packed < 16:
        return rows_packed                 # single full-extent block (tiny input)
    # At least 2 grid steps: shards across v7x's two TensorCores and keeps
    # DMA/compute pipelining alive even for mid-size activations.
    half = -(-rows_packed // 2)            # ceil(rows / 2)
    half = -(-half // 8) * 8               # round up to a multiple of 8
    return min(max_tile, half)


@functools.partial(jax.jit, static_argnames=("eps",))
def layernorm_pallas(x, gamma, beta, *, eps=_EPS):
    """LayerNorm over the last dim of x (any leading dims), via Pallas."""
    orig_shape = x.shape
    dim = orig_shape[-1]
    rows = 1
    for s in orig_shape[:-1]:
        rows *= s

    # Lane-dense repack: fold g = lcm(dim, 128)/dim consecutive rows into the
    # lane axis so the block's last dim is a multiple of 128 whenever possible.
    if dim % _LANES == 0:
        groups = 1
    else:
        g = math.lcm(dim, _LANES) // dim
        groups = g if (g <= _MAX_GROUPS and rows % g == 0) else 1
    d_packed = groups * dim
    rows_packed = rows // groups

    # Contiguous row-major reshape: no extra HBM copy.
    x2 = x.reshape(rows_packed, d_packed)

    # Tiny constant matrices (built outside the kernel, constant index_map):
    gamma_f = gamma.reshape(-1).astype(jnp.float32)
    beta_f = beta.reshape(-1).astype(jnp.float32)
    lane_grp = jnp.arange(d_packed, dtype=jnp.int32) // dim
    segt = (lane_grp[None, :] ==
            jnp.arange(groups, dtype=jnp.int32)[:, None]).astype(jnp.float32)
    segtg = segt * jnp.tile(gamma_f, groups)[None, :]          # gamma pre-folded
    beta2 = jnp.tile(beta_f, groups).reshape(1, d_packed)

    itemsize = jnp.dtype(x.dtype).itemsize
    tile_rows = _choose_tile_rows(rows_packed, d_packed, itemsize)
    grid = (pl.cdiv(rows_packed, tile_rows),)   # ragged last block, no padding

    kernel = functools.partial(_layernorm_kernel, dim=dim, eps=eps)

    out2 = pl.pallas_call(
        kernel,
        out_shape=jax.ShapeDtypeStruct((rows_packed, d_packed), x.dtype),
        grid_spec=pltpu.PrefetchScalarGridSpec(
            num_scalar_prefetch=0,
            grid=grid,
            in_specs=[
                pl.BlockSpec((tile_rows, d_packed), lambda i: (i, 0)),
                pl.BlockSpec((groups, d_packed), lambda i: (0, 0)),
                pl.BlockSpec((groups, d_packed), lambda i: (0, 0)),
                pl.BlockSpec((1, d_packed), lambda i: (0, 0)),
            ],
            out_specs=pl.BlockSpec((tile_rows, d_packed), lambda i: (i, 0)),
        ),
        compiler_params=pltpu.CompilerParams(
            dimension_semantics=("parallel",),
            vmem_limit_bytes=32 * 1024 * 1024,
        ),
    )(x2, segt, segtg, beta2)

    return out2.reshape(orig_shape)


class LayerNormalize:
    """JAX/Pallas port of the PyTorch LayerNormalize(dim, fn) wrapper."""

    def __init__(self, dim, fn):
        # nn.LayerNorm default init: weight = 1, bias = 0 (matches PyTorch).
        self.gamma = jnp.ones((dim,), jnp.float32)
        self.beta = jnp.zeros((dim,), jnp.float32)
        self.fn = fn

    def __call__(self, x, **kwargs):
        # TODO(synk): for best perf, fuse this LN into the wrapped fn's kernel
        # (Attention/MLP) to avoid a standalone x-sized HBM round trip.
        return self.fn(layernorm_pallas(x, self.gamma, self.beta), **kwargs)


if __name__ == "__main__":
    key = jax.random.PRNGKey(0)
    k_x, k_g, k_b = jax.random.split(key, 3)

    batch, seq, dim = 2, 8, 32
    x = jax.random.normal(k_x, (batch, seq, dim), jnp.float32)

    # `fn` is the wrapped sub-module (Attention/MLP in the ViT); arbitrary glue.
    # TODO(synk): plug the real wrapped Attention/MLP JAX callable in here.
    module = LayerNormalize(dim, fn=lambda y: y)

    # Override the default (weight=1, bias=0) affine with deterministic values
    # so the affine path is numerically exercised by the check below.
    module.gamma = jax.random.normal(k_g, (dim,), jnp.float32) * 0.1 + 1.0
    module.beta = jax.random.normal(k_b, (dim,), jnp.float32) * 0.1

    out = jax.block_until_ready(module(x))

    # Reference check against PyTorch nn.LayerNorm semantics (biased variance,
    # eps inside the sqrt).
    xf = x.astype(jnp.float32)
    mean = jnp.mean(xf, axis=-1, keepdims=True)
    var = jnp.mean((xf - mean) ** 2, axis=-1, keepdims=True)
    ref = (xf - mean) / jnp.sqrt(var + _EPS) * module.gamma + module.beta

    assert out.shape == x.shape and out.dtype == x.dtype
    assert jnp.max(jnp.abs(out - ref)) < 2e-5

    print("KERNEL_OK")
</pallas_src>

<mosaic_0001>
module attributes {stable_mosaic.version = 11 : i64} {
  func.func @_layernorm_kernel(%arg0: i32, %arg1: memref<4x128xf32, #tpu.memory_space<vmem>>, %arg2: memref<4x128xf32, #tpu.memory_space<vmem>>, %arg3: memref<4x128xf32, #tpu.memory_space<vmem>>, %arg4: memref<1x128xf32, #tpu.memory_space<vmem>>, %arg5: memref<4x128xf32, #tpu.memory_space<vmem>>) attributes {dimension_semantics = [#tpu.dimension_semantics<parallel>], iteration_bounds = array<i64: 1>, scalar_prefetch = 0 : i64, scratch_operands = 0 : i64, tpu.core_type = #tpu.core_type<tc>, window_params = [{transform_indices = @transform_0, window_bounds = array<i64: 4, 128>}, {pipeline_mode = #tpu.pipeline_mode<synchronous>, transform_indices = @transform_1, window_bounds = array<i64: 4, 128>}, {pipeline_mode = #tpu.pipeline_mode<synchronous>, transform_indices = @transform_2, window_bounds = array<i64: 4, 128>}, {pipeline_mode = #tpu.pipeline_mode<synchronous>, transform_indices = @transform_3, window_bounds = array<i64: 1, 128>}, {transform_indices = @transform_4, window_bounds = array<i64: 4, 128>}]} {
    %c0 = arith.constant 0 : index
    %c0_0 = arith.constant 0 : index
    %0 = vector.load %arg1[%c0, %c0_0] : memref<4x128xf32, #tpu.memory_space<vmem>>, vector<4x128xf32>
    %c0_1 = arith.constant 0 : index
    %c0_2 = arith.constant 0 : index
    %1 = vector.load %arg2[%c0_1, %c0_2] : memref<4x128xf32, #tpu.memory_space<vmem>>, vector<4x128xf32>
    %c0_3 = arith.constant 0 : index
    %c0_4 = arith.constant 0 : index
    %2 = vector.load %arg3[%c0_3, %c0_4] : memref<4x128xf32, #tpu.memory_space<vmem>>, vector<4x128xf32>
    %c0_5 = arith.constant 0 : index
    %c0_6 = arith.constant 0 : index
    %3 = vector.load %arg4[%c0_5, %c0_6] : memref<1x128xf32, #tpu.memory_space<vmem>>, vector<1x128xf32>
    %cst = arith.constant dense<0.000000e+00> : vector<4x4xf32>
    %4 = tpu.matmul %0, %1, %cst {dimension_numbers = #tpu.dot_dimension_numbers<[1], [1], [0], [0], [0, 0, 1, 0], [], []>} : vector<4x128xf32>, vector<4x128xf32>, vector<4x4xf32> -> vector<4x4xf32>
    %5 = arith.mulf %0, %0 : vector<4x128xf32>
    %cst_7 = arith.constant dense<0.000000e+00> : vector<4x4xf32>
    %6 = tpu.matmul %5, %1, %cst_7 {dimension_numbers = #tpu.dot_dimension_numbers<[1], [1], [0], [0], [0, 0, 1, 0], [], []>} : vector<4x128xf32>, vector<4x128xf32>, vector<4x4xf32> -> vector<4x4xf32>
    %cst_8 = arith.constant 3.125000e-02 : f32
    %7 = vector.broadcast %cst_8 : f32 to vector<4x4xf32>
    %8 = arith.mulf %4, %7 : vector<4x4xf32>
    %cst_9 = arith.constant 3.125000e-02 : f32
    %9 = vector.broadcast %cst_9 : f32 to vector<4x4xf32>
    %10 = arith.mulf %6, %9 : vector<4x4xf32>
    %11 = arith.mulf %8, %8 : vector<4x4xf32>
    %12 = arith.subf %10, %11 : vector<4x4xf32>
    %cst_10 = arith.constant 0.000000e+00 : f32
    %13 = vector.broadcast %cst_10 : f32 to vector<4x4xf32>
    %14 = arith.maximumf %12, %13 : vector<4x4xf32>
    %cst_11 = arith.constant 9.99999974E-6 : f32
    %15 = vector.broadcast %cst_11 : f32 to vector<4x4xf32>
    %16 = arith.addf %14, %15 : vector<4x4xf32>
    %17 = math.rsqrt %16 : vector<4x4xf32>
    %cst_12 = arith.constant dense<0.000000e+00> : vector<4x128xf32>
    %18 = tpu.matmul %17, %2, %cst_12 {dimension_numbers = #tpu.dot_dimension_numbers<[1], [0], [0], [1], [0, 0, 1, 1], [], []>} : vector<4x4xf32>, vector<4x128xf32>, vector<4x128xf32> -> vector<4x128xf32>
    %19 = arith.mulf %8, %17 : vector<4x4xf32>
    %cst_13 = arith.constant dense<0.000000e+00> : vector<4x128xf32>
    %20 = tpu.matmul %19, %2, %cst_13 {dimension_numbers = #tpu.dot_dimension_numbers<[1], [0], [0], [1], [0, 0, 1, 1], [], []>} : vector<4x4xf32>, vector<4x128xf32>, vector<4x128xf32> -> vector<4x128xf32>
    %21 = arith.mulf %0, %18 : vector<4x128xf32>
    %22 = arith.subf %21, %20 : vector<4x128xf32>
    %23 = vector.broadcast %3 : vector<1x128xf32> to vector<4x128xf32>
    %24 = arith.addf %22, %23 : vector<4x128xf32>
    %c0_14 = arith.constant 0 : index
    %c0_15 = arith.constant 0 : index
    %25 = vector.load %arg5[%c0_14, %c0_15] : memref<4x128xf32, #tpu.memory_space<vmem>>, vector<4x128xf32>
    tpu.vector_store %arg5[%c0_14, %c0_15], %24 {strides = array<i32>} : memref<4x128xf32, #tpu.memory_space<vmem>>, vector<4x128xf32>,
    return
  }
  func.func @transform_0(%arg0: i32) -> (i32, i32) {
    %c0_i32 = arith.constant 0 : i32
    %c0_i32_0 = arith.constant 0 : i32
    return %arg0, %c0_i32 : i32, i32
  }
  func.func @transform_1(%arg0: i32) -> (i32, i32) {
    %c0_i32 = arith.constant 0 : i32
    %c0_i32_0 = arith.constant 0 : i32
    %c0_i32_1 = arith.constant 0 : i32
    return %c0_i32, %c0_i32_0 : i32, i32
  }
  func.func @transform_2(%arg0: i32) -> (i32, i32) {
    %c0_i32 = arith.constant 0 : i32
    %c0_i32_0 = arith.constant 0 : i32
    %c0_i32_1 = arith.constant 0 : i32
    return %c0_i32, %c0_i32_0 : i32, i32
  }
  func.func @transform_3(%arg0: i32) -> (i32, i32) {
    %c0_i32 = arith.constant 0 : i32
    %c0_i32_0 = arith.constant 0 : i32
    %c0_i32_1 = arith.constant 0 : i32
    return %c0_i32, %c0_i32_0 : i32, i32
  }
  func.func @transform_4(%arg0: i32) -> (i32, i32) {
    %c0_i32 = arith.constant 0 : i32
    %c0_i32_0 = arith.constant 0 : i32
    return %arg0, %c0_i32 : i32, i32
  }
}

</mosaic_0001>

<llo_original>
// kernel: tile.13
$region0: #{tile.13}
  #allocation0 [shape = 's32[1]{0}', space=sflag, size = 0x4, scoped, tag = 'scoped memory for tile.13']
  %s0 = inlined_call_operand.vmem [shape: f32[32], index: 0, kind: input, shape index: {}]
  %s1 = inlined_call_operand.vmem [shape: f32[4,32], index: 1, kind: output, shape index: {}]
  // Predicated region
  $region2: #{tile.13} parent=0 // pred_check
    _
  $region3: #{tile.13} parent=0 // pred_check_branch
    %3 = sbr.rel (0) target = $region5
  $region4: #{tile.13} parent=0 // pred_region
    _
  $region5: #{tile.13} parent=0 // pred_fallthru
    _
  %v4 = vld [vmem:[%s0] ss:$0 sm:$0xff]
  %5 = vst [vmem:[%s1] sm:$0xf] %v4

// kernel: mul.5
$region0: #{mul.5}
  %s0 = inlined_call_operand.vmem [shape: f32[4,32], index: 0, kind: input, shape index: {}]
  %s1 = inlined_call_operand.vmem [shape: f32[128], index: 1, kind: output, shape index: {}]
  $region1: #{mul.5} parent=0
    #allocation0 [shape = 'u8[4096]{0}', space=vmem, size = 0x1000, scoped, tag = 'scoped mem for output reshape']
    #allocation1 [shape = 'u8[4096]{0}', space=vmem, size = 0x1000, scoped, tag = 'scoped mem for input reshape']
    %s3 = sshllo.u32 0, 4
    %v4 = vld [vmem:[%s0] sm:%s3]
    %5 = vst [vmem:[#allocation1] sm:%s3] %v4
    %v6 = vld [vmem:[#allocation1] sm:$0x1]
    %vm7 = vcmask 261120
    %8 = vst.msk [vmem:[#allocation0] sm:$0x1] %vm7, %v6
    %s9 = scalar_lea.vmem [#allocation1], 3
    %v10 = vld [vmem:[%s9] sm:$0x1]
    %11 = vrot.lane.b32.xlu0 %v10, 96
    %v12 = vpop.permute.xlu0 %11
    %vm13 = vcmask 1048320
    %14 = vst.msk [vmem:[#allocation0] sm:$0x1] %vm13, %v12
    %s15 = scalar_lea.vmem [#allocation1], 2
    %v16 = vld [vmem:[%s15] sm:$0x1]
    %17 = vrot.lane.b32.xlu0 %v16, 64
    %v18 = vpop.permute.xlu0 %17
    %vm19 = vcmask 785920
    %20 = vst.msk [vmem:[#allocation0] sm:$0x1] %vm19, %v18
    %s21 = scalar_lea.vmem [#allocation1], 1
    %v22 = vld [vmem:[%s21] sm:$0x1]
    %23 = vrot.lane.b32.xlu0 %v22, 32
    %v24 = vpop.permute.xlu0 %23
    %vm25 = vcmask 523520
    %26 = vst.msk [vmem:[#allocation0] sm:$0x1] %vm25, %v24
    %s28 = sshllo.u32 0, 1
    %v30 = vld [vmem:[#allocation0] sm:%s28]
    %s31 = sshllo.u32 0, 1
    %32 = vst [vmem:[%s1] sm:%s31] %v30

// kernel: tile.19
$region0: #{tile.19}
  %s0 = inlined_call_operand.vmem [shape: f32[4,32], index: 0, kind: input, shape index: {}]
  %s1 = inlined_call_operand.vmem [shape: f32[1,128], index: 1, kind: output, shape index: {}]
  $region1: #{tile.19} parent=0
    #allocation0 [shape = 'u8[4096]{0}', space=vmem, size = 0x1000, scoped, tag = 'scoped mem for output reshape']
    #allocation1 [shape = 'u8[4096]{0}', space=vmem, size = 0x1000, scoped, tag = 'scoped mem for input reshape']
    %s3 = sshllo.u32 0, 4
    %v4 = vld [vmem:[%s0] sm:%s3]
    %5 = vst [vmem:[#allocation1] sm:%s3] %v4
    %v6 = vld [vmem:[#allocation1] sm:$0x1]
    %vm7 = vcmask 261120
    %8 = vst.msk [vmem:[#allocation0] sm:$0x1] %vm7, %v6
    %s9 = scalar_lea.vmem [#allocation1], 3
    %v10 = vld [vmem:[%s9] sm:$0x1]
    %11 = vrot.lane.b32.xlu0 %v10, 96
    %v12 = vpop.permute.xlu0 %11
    %vm13 = vcmask 1048320
    %14 = vst.msk [vmem:[#allocation0] sm:$0x1] %vm13, %v12
    %s15 = scalar_lea.vmem [#allocation1], 2
    %v16 = vld [vmem:[%s15] sm:$0x1]
    %17 = vrot.lane.b32.xlu0 %v16, 64
    %v18 = vpop.permute.xlu0 %17
    %vm19 = vcmask 785920
    %20 = vst.msk [vmem:[#allocation0] sm:$0x1] %vm19, %v18
    %s21 = scalar_lea.vmem [#allocation1], 1
    %v22 = vld [vmem:[%s21] sm:$0x1]
    %23 = vrot.lane.b32.xlu0 %v22, 32
    %v24 = vpop.permute.xlu0 %23
    %vm25 = vcmask 523520
    %26 = vst.msk [vmem:[#allocation0] sm:$0x1] %vm25, %v24
    %s28 = sshllo.u32 0, 1
    %v30 = vld [vmem:[#allocation0] sm:%s28]
    %s31 = sshllo.u32 0, 1
    %32 = vst [vmem:[%s1] sm:%s31] %v30

// kernel: layernorm_pallas.1
$region0: #{layernorm_pallas.1}
  #allocation0 [shape = 'u32[]', space=smem, size = 0x4, offset = 0x4, fixed_abs, tag = 'smem constant byte address 0x4 - core index']
  #allocation1 [shape = 'u32[144,128]{1,0:T(1,128)}', space=vmem, size = 0x12000, scoped, tag = 'internal scratch']
  %s0 = inlined_call_operand.vmem [shape: f32[4,128], index: 0, kind: input, shape index: {}]
  %s1 = inlined_call_operand.vmem [shape: f32[4,128], index: 1, kind: input, shape index: {}]
  %s2 = inlined_call_operand.vmem [shape: f32[4,128], index: 2, kind: input, shape index: {}]
  %s3 = inlined_call_operand.vmem [shape: f32[1,128], index: 3, kind: input, shape index: {}]
  %s4 = inlined_call_operand.vmem [shape: f32[4,128], index: 4, kind: output, shape index: {}]
  %s5 = sld [smem:[#allocation0]]
  $region26: #{layernorm_pallas.1} parent=0
    _
  %s7 = ssub.s32 1, %s5
  %s8 = scalar_select 0, %s7, %s5
  // Predicated region
  $region2: #{layernorm_pallas.1} parent=0 // pred_check
    _
  $region3: #{layernorm_pallas.1} parent=0 // pred_check_branch
    %10 = sbr.rel (0) target = $region5
  $region4: #{layernorm_pallas.1} parent=0 // pred_region
    _
  $region5: #{layernorm_pallas.1} parent=0 // pred_fallthru
    _
  // Predicated region
  $region6: #{layernorm_pallas.1} parent=0 // pred_check
    _
  $region7: #{layernorm_pallas.1} parent=0 // pred_check_branch
    %12 = sbr.rel (0) target = $region9
  $region8: #{layernorm_pallas.1} parent=0 // pred_region
    _
  $region9: #{layernorm_pallas.1} parent=0 // pred_fallthru
    _
  // Predicated region
  $region10: #{layernorm_pallas.1} parent=0 // pred_check
    _
  $region11: #{layernorm_pallas.1} parent=0 // pred_check_branch
    %14 = sbr.rel (0) target = $region13
  $region12: #{layernorm_pallas.1} parent=0 // pred_region
    _
  $region13: #{layernorm_pallas.1} parent=0 // pred_fallthru
    _
  // Predicated region
  $region14: #{layernorm_pallas.1} parent=0 // pred_check
    _
  $region15: #{layernorm_pallas.1} parent=0 // pred_check_branch
    %16 = sbr.rel (0) target = $region17
  $region16: #{layernorm_pallas.1} parent=0 // pred_region
    _
  $region17: #{layernorm_pallas.1} parent=0 // pred_fallthru
    _
  %v17 = vld [vmem:[%s0] sm:$0xf]
  %v18 = vld [vmem:[%s1] sm:$0xf]
  %v19 = vld [vmem:[%s2] sm:$0xf]
  %v20 = vld [vmem:[%s3] sm:$0x1]
  %21 = vmatprep.subr.mxu0 0.0
  %22 = vmatpush1.xpose.msra.mxu0 %v18
  %23 = vmatprep.subr.mxu0 0.0
  %24 = vmatpush1.xpose.msra.mxu0 0.0
  %25 = vmatprep.subr.mxu0 0.0
  %26 = vmatpush1.xpose.msra.mxu0 0.0
  %27 = vmatprep.subr.mxu0 0.0
  %28 = vmatpush1.xpose.msra.mxu0 0.0
  %29 = vmatprep.subr.mxu0 0.0
  %30 = vmatpush1.xpose.msra.mxu0 0.0
  %31 = vmatprep.subr.mxu0 0.0
  %32 = vmatpush1.xpose.msra.mxu0 0.0
  %33 = vmatprep.subr.mxu0 0.0
  %34 = vmatpush1.xpose.msra.mxu0 0.0
  %35 = vmatprep.subr.mxu0 0.0
  %36 = vmatpush1.xpose.msra.mxu0 0.0
  %37 = vmatprep.subr.mxu0 0.0
  %38 = vmatpush1.xpose.msra.mxu0 0.0
  %39 = vmatprep.subr.mxu0 0.0
  %40 = vmatpush1.xpose.msra.mxu0 0.0
  %41 = vmatprep.subr.mxu0 0.0
  %42 = vmatpush1.xpose.msra.mxu0 0.0
  %43 = vmatprep.subr.mxu0 0.0
  %44 = vmatpush1.xpose.msra.mxu0 0.0
  %45 = vmatprep.subr.mxu0 0.0
  %46 = vmatpush1.xpose.msra.mxu0 0.0
  %47 = vmatprep.subr.mxu0 0.0
  %48 = vmatpush1.xpose.msra.mxu0 0.0
  %49 = vmatprep.subr.mxu0 0.0
  %50 = vmatpush1.xpose.msra.mxu0 0.0
  %51 = vmatprep.subr.mxu0 0.0
  %52 = vmatpush1.xpose.msra.mxu0 0.0
  %53 = vmatprep.subr.mxu0 0.0
  %54 = vmatpush1.xpose.msra.mxu0 0.0
  %55 = vmatprep.subr.mxu0 0.0
  %56 = vmatpush1.xpose.msra.mxu0 0.0
  %57 = vmatprep.subr.mxu0 0.0
  %58 = vmatpush1.xpose.msra.mxu0 0.0
  %59 = vmatprep.subr.mxu0 0.0
  %60 = vmatpush1.xpose.msra.mxu0 0.0
  %61 = vmatprep.subr.mxu0 0.0
  %62 = vmatpush1.xpose.msra.mxu0 0.0
  %63 = vmatprep.subr.mxu0 0.0
  %64 = vmatpush1.xpose.msra.mxu0 0.0
  %65 = vmatprep.subr.mxu0 0.0
  %66 = vmatpush1.xpose.msra.mxu0 0.0
  %67 = vmatprep.subr.mxu0 0.0
  %68 = vmatpush1.xpose.msra.mxu0 0.0
  %69 = vmatprep.subr.mxu0 0.0
  %70 = vmatpush1.xpose.msra.mxu0 0.0
  %71 = vmatprep.subr.mxu0 0.0
  %72 = vmatpush1.xpose.msra.mxu0 0.0
  %73 = vmatprep.subr.mxu0 0.0
  %74 = vmatpush1.xpose.msra.mxu0 0.0
  %75 = vmatprep.subr.mxu0 0.0
  %76 = vmatpush1.xpose.msra.mxu0 0.0
  %77 = vmatprep.subr.mxu0 0.0
  %78 = vmatpush1.xpose.msra.mxu0 0.0
  %79 = vmatprep.subr.mxu0 0.0
  %80 = vmatpush1.xpose.msra.mxu0 0.0
  %81 = vmatprep.subr.mxu0 0.0
  %82 = vmatpush1.xpose.msra.mxu0 0.0
  %83 = vmatprep.subr.mxu0 0.0
  %84 = vmatpush1.xpose.msra.mxu0 0.0
  %85 = vmatprep.mubr.f32.mxu0 0.0
  %86 = vmatmul.mubr.f32.gmra.mrb[0].mxu0 %v17
  %v87 = vpop.f32.mrb[0].mxu0
  %v88 = vadd.f32 0.0, %v87
  %v89 = vpop.f32.mrb[0].mxu0
  %90 = vdwg.mxu0
  %v91 = vmul.f32 %v17, %v17
  %92 = vmatprep.subr.mxu0 0.0
  %93 = vmatpush1.xpose.msra.mxu0 %v18
  %94 = vmatprep.subr.mxu0 0.0
  %95 = vmatpush1.xpose.msra.mxu0 0.0
  %96 = vmatprep.subr.mxu0 0.0
  %97 = vmatpush1.xpose.msra.mxu0 0.0
  %98 = vmatprep.subr.mxu0 0.0
  %99 = vmatpush1.xpose.msra.mxu0 0.0
  %100 = vmatprep.subr.mxu0 0.0
  %101 = vmatpush1.xpose.msra.mxu0 0.0
  %102 = vmatprep.subr.mxu0 0.0
  %103 = vmatpush1.xpose.msra.mxu0 0.0
  %104 = vmatprep.subr.mxu0 0.0
  %105 = vmatpush1.xpose.msra.mxu0 0.0
  %106 = vmatprep.subr.mxu0 0.0
  %107 = vmatpush1.xpose.msra.mxu0 0.0
  %108 = vmatprep.subr.mxu0 0.0
  %109 = vmatpush1.xpose.msra.mxu0 0.0
  %110 = vmatprep.subr.mxu0 0.0
  %111 = vmatpush1.xpose.msra.mxu0 0.0
  %112 = vmatprep.subr.mxu0 0.0
  %113 = vmatpush1.xpose.msra.mxu0 0.0
  %114 = vmatprep.subr.mxu0 0.0
  %115 = vmatpush1.xpose.msra.mxu0 0.0
  %116 = vmatprep.subr.mxu0 0.0
  %117 = vmatpush1.xpose.msra.mxu0 0.0
  %118 = vmatprep.subr.mxu0 0.0
  %119 = vmatpush1.xpose.msra.mxu0 0.0
  %120 = vmatprep.subr.mxu0 0.0
  %121 = vmatpush1.xpose.msra.mxu0 0.0
  %122 = vmatprep.subr.mxu0 0.0
  %123 = vmatpush1.xpose.msra.mxu0 0.0
  %124 = vmatprep.subr.mxu0 0.0
  %125 = vmatpush1.xpose.msra.mxu0 0.0
  %126 = vmatprep.subr.mxu0 0.0
  %127 = vmatpush1.xpose.msra.mxu0 0.0
  %128 = vmatprep.subr.mxu0 0.0
  %129 = vmatpush1.xpose.msra.mxu0 0.0
  %130 = vmatprep.subr.mxu0 0.0
  %131 = vmatpush1.xpose.msra.mxu0 0.0
  %132 = vmatprep.subr.mxu0 0.0
  %133 = vmatpush1.xpose.msra.mxu0 0.0
  %134 = vmatprep.subr.mxu0 0.0
  %135 = vmatpush1.xpose.msra.mxu0 0.0
  %136 = vmatprep.subr.mxu0 0.0
  %137 = vmatpush1.xpose.msra.mxu0 0.0
  %138 = vmatprep.subr.mxu0 0.0
  %139 = vmatpush1.xpose.msra.mxu0 0.0
  %140 = vmatprep.subr.mxu0 0.0
  %141 = vmatpush1.xpose.msra.mxu0 0.0
  %142 = vmatprep.subr.mxu0 0.0
  %143 = vmatpush1.xpose.msra.mxu0 0.0
  %144 = vmatprep.subr.mxu0 0.0
  %145 = vmatpush1.xpose.msra.mxu0 0.0
  %146 = vmatprep.subr.mxu0 0.0
  %147 = vmatpush1.xpose.msra.mxu0 0.0
  %148 = vmatprep.subr.mxu0 0.0
  %149 = vmatpush1.xpose.msra.mxu0 0.0
  %150 = vmatprep.subr.mxu0 0.0
  %151 = vmatpush1.xpose.msra.mxu0 0.0
  %152 = vmatprep.subr.mxu0 0.0
  %153 = vmatpush1.xpose.msra.mxu0 0.0
  %154 = vmatprep.subr.mxu0 0.0
  %155 = vmatpush1.xpose.msra.mxu0 0.0
  %156 = vmatprep.mubr.f32.mxu0 0.0
  %157 = vmatmul.mubr.f32.gmra.mrb[0].mxu0 %v91
  %v158 = vpop.f32.mrb[0].mxu0
  %v159 = vadd.f32 0.0, %v158
  %v160 = vpop.f32.mrb[0].mxu0
  %161 = vdwg.mxu0
  %v162 = vmul.f32 %v88, 0.03125
  %v163 = vmul.f32 %v159, 0.03125
  %v164 = vmul.f32 %v162, %v162
  %v165 = vsub.f32 %v163, %v164
  %v166 = vmax.f32 %v165, 0.0
  %v167 = vadd.f32 %v166, 1e-05
  %v168 = vrsqrt.pop %v167
  %vm169 = vcmask 31744
  %v171 = vsel %vm169, %v168, 0
  %vm173 = vcmask 1043456
  %v175 = vsel %vm173, %v19, 0
  %177 = vmatprep.subr.mxu0 0.0
  %178 = vmatpush1.msra.mxu0 %v175
  %179 = vmatprep.subr.mxu0 0.0
  %180 = vmatpush1.msra.mxu0 0.0
  %181 = vmatprep.subr.mxu0 0.0
  %182 = vmatpush1.msra.mxu0 0.0
  %183 = vmatprep.subr.mxu0 0.0
  %184 = vmatpush1.msra.mxu0 0.0
  %185 = vmatprep.subr.mxu0 0.0
  %186 = vmatpush1.msra.mxu0 0.0
  %187 = vmatprep.subr.mxu0 0.0
  %188 = vmatpush1.msra.mxu0 0.0
  %189 = vmatprep.subr.mxu0 0.0
  %190 = vmatpush1.msra.mxu0 0.0
  %191 = vmatprep.subr.mxu0 0.0
  %192 = vmatpush1.msra.mxu0 0.0
  %193 = vmatprep.subr.mxu0 0.0
  %194 = vmatpush1.msra.mxu0 0.0
  %195 = vmatprep.subr.mxu0 0.0
  %196 = vmatpush1.msra.mxu0 0.0
  %197 = vmatprep.subr.mxu0 0.0
  %198 = vmatpush1.msra.mxu0 0.0
  %199 = vmatprep.subr.mxu0 0.0
  %200 = vmatpush1.msra.mxu0 0.0
  %201 = vmatprep.subr.mxu0 0.0
  %202 = vmatpush1.msra.mxu0 0.0
  %203 = vmatprep.subr.mxu0 0.0
  %204 = vmatpush1.msra.mxu0 0.0
  %205 = vmatprep.subr.mxu0 0.0
  %206 = vmatpush1.msra.mxu0 0.0
  %207 = vmatprep.subr.mxu0 0.0
  %208 = vmatpush1.msra.mxu0 0.0
  %209 = vmatprep.subr.mxu0 0.0
  %210 = vmatpush1.msra.mxu0 0.0
  %211 = vmatprep.subr.mxu0 0.0
  %212 = vmatpush1.msra.mxu0 0.0
  %213 = vmatprep.subr.mxu0 0.0
  %214 = vmatpush1.msra.mxu0 0.0
  %215 = vmatprep.subr.mxu0 0.0
  %216 = vmatpush1.msra.mxu0 0.0
  %217 = vmatprep.subr.mxu0 0.0
  %218 = vmatpush1.msra.mxu0 0.0
  %219 = vmatprep.subr.mxu0 0.0
  %220 = vmatpush1.msra.mxu0 0.0
  %221 = vmatprep.subr.mxu0 0.0
  %222 = vmatpush1.msra.mxu0 0.0
  %223 = vmatprep.subr.mxu0 0.0
  %224 = vmatpush1.msra.mxu0 0.0
  %225 = vmatprep.subr.mxu0 0.0
  %226 = vmatpush1.msra.mxu0 0.0
  %227 = vmatprep.subr.mxu0 0.0
  %228 = vmatpush1.msra.mxu0 0.0
  %229 = vmatprep.subr.mxu0 0.0
  %230 = vmatpush1.msra.mxu0 0.0
  %231 = vmatprep.subr.mxu0 0.0
  %232 = vmatpush1.msra.mxu0 0.0
  %233 = vmatprep.subr.mxu0 0.0
  %234 = vmatpush1.msra.mxu0 0.0
  %235 = vmatprep.subr.mxu0 0.0
  %236 = vmatpush1.msra.mxu0 0.0
  %237 = vmatprep.subr.mxu0 0.0
  %238 = vmatpush1.msra.mxu0 0.0
  %239 = vmatprep.subr.mxu0 0.0
  %240 = vmatpush1.msra.mxu0 0.0
  %241 = vmatprep.mubr.f32.mxu0 0.0
  %242 = vmatmul.mubr.f32.gmra.mrb[0].mxu0 %v171
  %v243 = vpop.f32.mrb[0].mxu0
  %v244 = vadd.f32 0.0, %v243
  %v245 = vpop.f32.mrb[0].mxu0
  %246 = vdwg.mxu0
  %v247 = vmul.f32 %v162, %v168
  %v249 = vsel %vm169, %v247, 0
  %251 = vmatprep.subr.mxu0 0.0
  %252 = vmatpush1.msra.mxu0 %v175
  %253 = vmatprep.subr.mxu0 0.0
  %254 = vmatpush1.msra.mxu0 0.0
  %255 = vmatprep.subr.mxu0 0.0
  %256 = vmatpush1.msra.mxu0 0.0
  %257 = vmatprep.subr.mxu0 0.0
  %258 = vmatpush1.msra.mxu0 0.0
  %259 = vmatprep.subr.mxu0 0.0
  %260 = vmatpush1.msra.mxu0 0.0
  %261 = vmatprep.subr.mxu0 0.0
  %262 = vmatpush1.msra.mxu0 0.0
  %263 = vmatprep.subr.mxu0 0.0
  %264 = vmatpush1.msra.mxu0 0.0
  %265 = vmatprep.subr.mxu0 0.0
  %266 = vmatpush1.msra.mxu0 0.0
  %267 = vmatprep.subr.mxu0 0.0
  %268 = vmatpush1.msra.mxu0 0.0
  %269 = vmatprep.subr.mxu0 0.0
  %270 = vmatpush1.msra.mxu0 0.0
  %271 = vmatprep.subr.mxu0 0.0
  %272 = vmatpush1.msra.mxu0 0.0
  %273 = vmatprep.subr.mxu0 0.0
  %274 = vmatpush1.msra.mxu0 0.0
  %275 = vmatprep.subr.mxu0 0.0
  %276 = vmatpush1.msra.mxu0 0.0
  %277 = vmatprep.subr.mxu0 0.0
  %278 = vmatpush1.msra.mxu0 0.0
  %279 = vmatprep.subr.mxu0 0.0
  %280 = vmatpush1.msra.mxu0 0.0
  %281 = vmatprep.subr.mxu0 0.0
  %282 = vmatpush1.msra.mxu0 0.0
  %283 = vmatprep.subr.mxu0 0.0
  %284 = vmatpush1.msra.mxu0 0.0
  %285 = vmatprep.subr.mxu0 0.0
  %286 = vmatpush1.msra.mxu0 0.0
  %287 = vmatprep.subr.mxu0 0.0
  %288 = vmatpush1.msra.mxu0 0.0
  %289 = vmatprep.subr.mxu0 0.0
  %290 = vmatpush1.msra.mxu0 0.0
  %291 = vmatprep.subr.mxu0 0.0
  %292 = vmatpush1.msra.mxu0 0.0
  %293 = vmatprep.subr.mxu0 0.0
  %294 = vmatpush1.msra.mxu0 0.0
  %295 = vmatprep.subr.mxu0 0.0
  %296 = vmatpush1.msra.mxu0 0.0
  %297 = vmatprep.subr.mxu0 0.0
  %298 = vmatpush1.msra.mxu0 0.0
  %299 = vmatprep.subr.mxu0 0.0
  %300 = vmatpush1.msra.mxu0 0.0
  %301 = vmatprep.subr.mxu0 0.0
  %302 = vmatpush1.msra.mxu0 0.0
  %303 = vmatprep.subr.mxu0 0.0
  %304 = vmatpush1.msra.mxu0 0.0
  %305 = vmatprep.subr.mxu0 0.0
  %306 = vmatpush1.msra.mxu0 0.0
  %307 = vmatprep.subr.mxu0 0.0
  %308 = vmatpush1.msra.mxu0 0.0
  %309 = vmatprep.subr.mxu0 0.0
  %310 = vmatpush1.msra.mxu0 0.0
  %311 = vmatprep.subr.mxu0 0.0
  %312 = vmatpush1.msra.mxu0 0.0
  %313 = vmatprep.subr.mxu0 0.0
  %314 = vmatpush1.msra.mxu0 0.0
  %315 = vmatprep.mubr.f32.mxu0 0.0
  %316 = vmatmul.mubr.f32.gmra.mrb[0].mxu0 %v249
  %v317 = vpop.f32.mrb[0].mxu0
  %v318 = vadd.f32 0.0, %v317
  %v319 = vpop.f32.mrb[0].mxu0
  %320 = vdwg.mxu0
  %v321 = vmul.f32 %v17, %v244
  %v322 = vsub.f32 %v321, %v318
  %v324 = vlaneseq
  %v325 = vshrl.u32 %v324, 7
  %v326 = vsub.s32 0, %v325
  %v327 = vrot.slane %v20, %v326
  %v329 = vadd.f32 %v322, %v327
  %330 = vst [vmem:[%s4] sm:$0xf] %v329
  // Predicated region
  $region18: #{layernorm_pallas.1} parent=0 // pred_check
    _
  $region19: #{layernorm_pallas.1} parent=0 // pred_check_branch
    %332 = sbr.rel (0) target = $region21
  $region20: #{layernorm_pallas.1} parent=0 // pred_region
    _
  $region21: #{layernorm_pallas.1} parent=0 // pred_fallthru
    _
  // Predicated region
  $region22: #{layernorm_pallas.1} parent=0 // pred_check
    _
  $region23: #{layernorm_pallas.1} parent=0 // pred_check_branch
    %334 = sbr.rel (0) target = $region25
  $region24: #{layernorm_pallas.1} parent=0 // pred_region
    _
  $region25: #{layernorm_pallas.1} parent=0 // pred_fallthru
    _

</llo_original>
